<compile_context>
chip_gen: v7x
topology: tpu7x:2x2x1
jax: 0.10.0
libtpu: 0.0.40
codegen_flags: <defaults>
</compile_context>

<pallas_src>
import functools
import math

import jax
import jax.numpy as jnp
from jax.experimental import pallas as pl
from jax.experimental.pallas import tpu as pltpu


def _round_up(a, b):
    return ((a + b - 1) // b) * b


def _vmem_ceiling_bytes():
    """Generation-aware VMEM request ceiling (leave headroom for compiler scratch)."""
    cap = None
    try:
        info = pltpu.get_tpu_info()
        cap = int(getattr(info, "vmem_capacity_bytes", 0)) or None
    except Exception:
        cap = None
    if cap is None:
        cap = 64 * 2 ** 20          # conservative default: assume a 64 MiB/TC part
    if cap >= 96 * 2 ** 20:         # v5e / v6e: 128 MiB physical per TC
        return 100 * 2 ** 20
    return min(48 * 2 ** 20, (cap * 3) // 4)   # v7x-class: 64 MiB physical per TC


def _highway_kernel(*refs, n):
    # refs = (x_part_refs..., w_ref, b_ref, o_ref)
    #   x_part_refs: one or more (tm, d_i) row tiles whose widths sum to <= Dp
    #   w_ref: (n, Dp, 2*Dp) -- pre-transposed to (in, out), [W_lin | W_gate] fused
    #   b_ref: (n, 1, 2*Dp)  -- [b_lin | b_gate], f32
    #   o_ref: (tm, Dp)
    *x_refs, w_ref, b_ref, o_ref = refs
    tm = o_ref.shape[0]
    dp = o_ref.shape[-1]

    parts = [r[...] for r in x_refs]
    width = sum(p.shape[-1] for p in parts)
    if width < dp:  # static lane padding up to Dp (only reachable on aligned parts)
        parts.append(jnp.zeros((tm, dp - width), parts[0].dtype))
    x = parts[0] if len(parts) == 1 else jnp.concatenate(parts, axis=-1)
    x = x.astype(jnp.float32)          # residual / accumulation dtype

    compute_dtype = w_ref.dtype        # MXU operand dtype (bf16 if weights are bf16)

    for i in range(n):                 # n is a small static Python int -> unrolled
        xd = x.astype(compute_dtype)
        # Plain (K)x(K,N) contraction: no RHS transpose on the MXU path.
        hg = jnp.dot(xd, w_ref[i], preferred_element_type=jnp.float32)
        hg = hg + b_ref[i]                               # (tm, 2*Dp) + (1, 2*Dp)
        h = jnp.maximum(hg[:, :dp], 0.0)                 # ReLU branch
        g = jax.nn.sigmoid(hg[:, dp:])                   # gate branch
        x = x + g * (h - x)                              # == g*h + (1-g)*x

    o_ref[...] = x.astype(o_ref.dtype)


def _highway_forward_impl(x1, x2, w_lin, b_lin, w_gate, b_gate, *,
                          tm=512, compute_dtype=None):
    """x1: (..., x1_dim), x2: (..., x2_dim) -> (..., input_size).

    w_lin / w_gate: (n, input_size, input_size), PyTorch nn.Linear (out, in) layout.
    b_lin / b_gate: (n, input_size).
    compute_dtype: optional MXU operand dtype (e.g. jnp.bfloat16); residual stays f32.
    """
    n, D, _ = w_lin.shape
    x1_dim = x1.shape[-1]
    x2_dim = x2.shape[-1]
    assert x1_dim + x2_dim == D, (x1_dim, x2_dim, D)

    lead = x1.shape[:-1]
    M = math.prod(lead)
    Dp = _round_up(D, 128)

    # ---- one-time weight prep (pad lanes, transpose (out,in)->(in,out), fuse) ----
    # Padded rows/cols are zero, so padded activation lanes stay exactly 0 through
    # the relu/sigmoid gating (sigmoid(0)=0.5 scales a zero lane -> still zero).
    if Dp != D:
        pad = Dp - D
        w_lin = jnp.pad(w_lin, ((0, 0), (0, pad), (0, pad)))
        w_gate = jnp.pad(w_gate, ((0, 0), (0, pad), (0, pad)))
        b_lin = jnp.pad(b_lin, ((0, 0), (0, pad)))
        b_gate = jnp.pad(b_gate, ((0, 0), (0, pad)))
    w_cat = jnp.concatenate(
        [jnp.swapaxes(w_lin, 1, 2), jnp.swapaxes(w_gate, 1, 2)], axis=-1)  # (n, Dp, 2Dp)
    if compute_dtype is not None:
        w_cat = w_cat.astype(compute_dtype)
    b_cat = jnp.concatenate([b_lin, b_gate], axis=-1).reshape(n, 1, 2 * Dp)
    b_cat = b_cat.astype(jnp.float32)

    # ---- activations --------------------------------------------------------------
    x1_2d = x1.reshape(M, x1_dim)
    x2_2d = x2.reshape(M, x2_dim)
    fuse_concat = (x1_dim % 128 == 0) and (x2_dim % 128 == 0)
    if fuse_concat:
        xs = [x1_2d, x2_2d]                     # lane-aligned parts: concat in-kernel
    else:
        xcat = jnp.concatenate([x1_2d, x2_2d], axis=-1)
        if Dp != D:
            xcat = jnp.pad(xcat, ((0, 0), (0, Dp - D)))
        xs = [xcat]                             # single lane-dense input slab

    out_dtype = x1.dtype
    act_bytes = jnp.dtype(out_dtype).itemsize
    w_bytes = w_cat.size * jnp.dtype(w_cat.dtype).itemsize
    b_bytes = b_cat.size * 4

    # ---- row tile: large, but guarantee >=2 grid steps when possible (v7x 2 TCs) --
    rows8 = _round_up(M, 8)
    tm_req = max(8, _round_up(tm, 8))
    if rows8 > tm_req:
        tm_eff = tm_req
    elif rows8 > 8:
        tm_eff = _round_up(pl.cdiv(rows8, 2), 8)
    else:
        tm_eff = 8

    vmem_ceiling = _vmem_ceiling_bytes()
    in_cols = sum(xi.shape[-1] for xi in xs)

    def est_vmem(tm_e):
        io = 2 * tm_e * in_cols * act_bytes + 2 * tm_e * Dp * act_bytes  # dbl-buffered I/O
        scratch = 12 * tm_e * Dp * 4                                     # f32 temporaries
        return 2 * (w_bytes + b_bytes) + io + scratch + (4 << 20)

    while est_vmem(tm_eff) > vmem_ceiling and tm_eff > 64:
        tm_eff = max(64, _round_up(tm_eff // 2, 8))

    grid = (pl.cdiv(M, tm_eff),)
    vmem_limit = int(min(vmem_ceiling, max(32 * 2 ** 20, est_vmem(tm_eff))))

    x_specs = [pl.BlockSpec((tm_eff, xi.shape[-1]), lambda i: (i, 0)) for xi in xs]
    in_specs = x_specs + [
        pl.BlockSpec((n, Dp, 2 * Dp), lambda i: (0, 0, 0)),   # fused, pre-transposed W
        pl.BlockSpec((n, 1, 2 * Dp), lambda i: (0, 0, 0)),    # fused bias (f32)
    ]

    out = pl.pallas_call(
        functools.partial(_highway_kernel, n=n),
        out_shape=jax.ShapeDtypeStruct((M, Dp), out_dtype),
        grid_spec=pltpu.PrefetchScalarGridSpec(
            num_scalar_prefetch=0,
            grid=grid,
            in_specs=in_specs,
            out_specs=pl.BlockSpec((tm_eff, Dp), lambda i: (i, 0)),
        ),
        compiler_params=pltpu.CompilerParams(
            dimension_semantics=("parallel",),
            vmem_limit_bytes=vmem_limit,
        ),
    )(*xs, w_cat, b_cat)

    if Dp != D:
        out = out[:, :D]                       # only when lane padding was added
    return out.reshape(*lead, D)


highway_forward = jax.jit(_highway_forward_impl,
                          static_argnames=("tm", "compute_dtype"))


def highway_reference(x1, x2, w_lin, b_lin, w_gate, b_gate):
    """Plain-JAX reference mirroring the PyTorch forward exactly."""
    n = w_lin.shape[0]
    x = jnp.concatenate([x1, x2], axis=-1)
    for i in range(n):
        h = jax.nn.relu(x @ w_lin[i].T + b_lin[i])
        g = jax.nn.sigmoid(x @ w_gate[i].T + b_gate[i])
        x = g * h + (1.0 - g) * x
    return x


if __name__ == "__main__":
    # Small shapes: batch=2, seq=8, x1_dim=64, x2_dim=64 -> input_size=128, n=2 layers.
    batch, seq = 2, 8
    x1_dim, x2_dim = 64, 64
    input_size = x1_dim + x2_dim
    n_layers = 2

    key = jax.random.PRNGKey(0)
    k1, k2, k3, k4, k5, k6 = jax.random.split(key, 6)

    x1 = jax.random.normal(k1, (batch, seq, x1_dim), dtype=jnp.float32)
    x2 = jax.random.normal(k2, (batch, seq, x2_dim), dtype=jnp.float32)

    # Deterministic parameter init (PyTorch nn.Linear convention: weight (out, in)).
    scale = float(input_size) ** -0.5
    w_lin = jax.random.uniform(k3, (n_layers, input_size, input_size),
                               minval=-scale, maxval=scale, dtype=jnp.float32)
    b_lin = jax.random.uniform(k4, (n_layers, input_size),
                               minval=-scale, maxval=scale, dtype=jnp.float32)
    w_gate = jax.random.uniform(k5, (n_layers, input_size, input_size),
                                minval=-scale, maxval=scale, dtype=jnp.float32)
    b_gate = jax.random.uniform(k6, (n_layers, input_size),
                                minval=-scale, maxval=scale, dtype=jnp.float32)

    out = highway_forward(x1, x2, w_lin, b_lin, w_gate, b_gate)
    out = jax.block_until_ready(out)

    ref = highway_reference(x1, x2, w_lin, b_lin, w_gate, b_gate)
    assert out.shape == (batch, seq, input_size), out.shape
    assert jnp.allclose(out, ref, atol=1e-4, rtol=1e-4), float(
        jnp.max(jnp.abs(out - ref)))

    print("KERNEL_OK")
</pallas_src>

<mosaic_0001>
module attributes {stable_mosaic.version = 11 : i64} {
  func.func @_highway_kernel(%arg0: i32, %arg1: memref<8x128xf32, #tpu.memory_space<vmem>>, %arg2: memref<2x128x256xf32, #tpu.memory_space<vmem>>, %arg3: memref<2x1x256xf32, #tpu.memory_space<vmem>>, %arg4: memref<8x128xf32, #tpu.memory_space<vmem>>) attributes {dimension_semantics = [#tpu.dimension_semantics<parallel>], iteration_bounds = array<i64: 2>, scalar_prefetch = 0 : i64, scratch_operands = 0 : i64, tpu.core_type = #tpu.core_type<tc>, window_params = [{transform_indices = @transform_0, window_bounds = array<i64: 8, 128>}, {pipeline_mode = #tpu.pipeline_mode<synchronous>, transform_indices = @transform_1, window_bounds = array<i64: 2, 128, 256>}, {pipeline_mode = #tpu.pipeline_mode<synchronous>, transform_indices = @transform_2, window_bounds = array<i64: 2, 1, 256>}, {transform_indices = @transform_3, window_bounds = array<i64: 8, 128>}]} {
    %c0 = arith.constant 0 : index
    %c0_0 = arith.constant 0 : index
    %0 = vector.load %arg1[%c0, %c0_0] : memref<8x128xf32, #tpu.memory_space<vmem>>, vector<8x128xf32>
    %c0_1 = arith.constant 0 : index
    %c0_2 = arith.constant 0 : index
    %c0_3 = arith.constant 0 : index
    %1 = vector.load %arg2[%c0_1, %c0_2, %c0_3] : memref<2x128x256xf32, #tpu.memory_space<vmem>>, vector<1x128x256xf32>
    %2 = vector.shape_cast %1 : vector<1x128x256xf32> to vector<128x256xf32>
    %cst = arith.constant dense<0.000000e+00> : vector<8x256xf32>
    %3 = tpu.matmul %0, %2, %cst {dimension_numbers = #tpu.dot_dimension_numbers<[1], [0], [0], [1], [0, 0, 1, 1], [], []>} : vector<8x128xf32>, vector<128x256xf32>, vector<8x256xf32> -> vector<8x256xf32>
    %c0_4 = arith.constant 0 : index
    %c0_5 = arith.constant 0 : index
    %c0_6 = arith.constant 0 : index
    %4 = vector.load %arg3[%c0_4, %c0_5, %c0_6] : memref<2x1x256xf32, #tpu.memory_space<vmem>>, vector<1x1x256xf32>
    %5 = vector.shape_cast %4 : vector<1x1x256xf32> to vector<1x256xf32>
    %6 = vector.broadcast %5 : vector<1x256xf32> to vector<8x256xf32>
    %7 = arith.addf %3, %6 : vector<8x256xf32>
    %8 = vector.extract_strided_slice %7 {offsets = [0, 0], sizes = [8, 128], strides = [1, 1]} : vector<8x256xf32> to vector<8x128xf32>
    %cst_7 = arith.constant 0.000000e+00 : f32
    %9 = vector.broadcast %cst_7 : f32 to vector<8x128xf32>
    %10 = arith.maximumf %8, %9 : vector<8x128xf32>
    %11 = vector.extract_strided_slice %7 {offsets = [0, 128], sizes = [8, 128], strides = [1, 1]} : vector<8x256xf32> to vector<8x128xf32>
    %12 = arith.negf %11 : vector<8x128xf32>
    %13 = math.exp %12 : vector<8x128xf32>
    %cst_8 = arith.constant 1.000000e+00 : f32
    %14 = vector.broadcast %cst_8 : f32 to vector<8x128xf32>
    %15 = arith.addf %14, %13 : vector<8x128xf32>
    %16 = arith.divf %14, %15 : vector<8x128xf32>
    %17 = arith.subf %10, %0 : vector<8x128xf32>
    %18 = arith.mulf %16, %17 : vector<8x128xf32>
    %19 = arith.addf %0, %18 : vector<8x128xf32>
    %c1 = arith.constant 1 : index
    %c0_9 = arith.constant 0 : index
    %c0_10 = arith.constant 0 : index
    %20 = vector.load %arg2[%c1, %c0_9, %c0_10] : memref<2x128x256xf32, #tpu.memory_space<vmem>>, vector<1x128x256xf32>
    %21 = vector.shape_cast %20 : vector<1x128x256xf32> to vector<128x256xf32>
    %cst_11 = arith.constant dense<0.000000e+00> : vector<8x256xf32>
    %22 = tpu.matmul %19, %21, %cst_11 {dimension_numbers = #tpu.dot_dimension_numbers<[1], [0], [0], [1], [0, 0, 1, 1], [], []>} : vector<8x128xf32>, vector<128x256xf32>, vector<8x256xf32> -> vector<8x256xf32>
    %c1_12 = arith.constant 1 : index
    %c0_13 = arith.constant 0 : index
    %c0_14 = arith.constant 0 : index
    %23 = vector.load %arg3[%c1_12, %c0_13, %c0_14] : memref<2x1x256xf32, #tpu.memory_space<vmem>>, vector<1x1x256xf32>
    %24 = vector.shape_cast %23 : vector<1x1x256xf32> to vector<1x256xf32>
    %25 = vector.broadcast %24 : vector<1x256xf32> to vector<8x256xf32>
    %26 = arith.addf %22, %25 : vector<8x256xf32>
    %27 = vector.extract_strided_slice %26 {offsets = [0, 0], sizes = [8, 128], strides = [1, 1]} : vector<8x256xf32> to vector<8x128xf32>
    %cst_15 = arith.constant 0.000000e+00 : f32
    %28 = vector.broadcast %cst_15 : f32 to vector<8x128xf32>
    %29 = arith.maximumf %27, %28 : vector<8x128xf32>
    %30 = vector.extract_strided_slice %26 {offsets = [0, 128], sizes = [8, 128], strides = [1, 1]} : vector<8x256xf32> to vector<8x128xf32>
    %31 = arith.negf %30 : vector<8x128xf32>
    %32 = math.exp %31 : vector<8x128xf32>
    %cst_16 = arith.constant 1.000000e+00 : f32
    %33 = vector.broadcast %cst_16 : f32 to vector<8x128xf32>
    %34 = arith.addf %33, %32 : vector<8x128xf32>
    %35 = arith.divf %33, %34 : vector<8x128xf32>
    %36 = arith.subf %29, %19 : vector<8x128xf32>
    %37 = arith.mulf %35, %36 : vector<8x128xf32>
    %38 = arith.addf %19, %37 : vector<8x128xf32>
    %c0_17 = arith.constant 0 : index
    %c0_18 = arith.constant 0 : index
    %39 = vector.load %arg4[%c0_17, %c0_18] : memref<8x128xf32, #tpu.memory_space<vmem>>, vector<8x128xf32>
    tpu.vector_store %arg4[%c0_17, %c0_18], %38 {strides = array<i32>} : memref<8x128xf32, #tpu.memory_space<vmem>>, vector<8x128xf32>,
    return
  }
  func.func @transform_0(%arg0: i32) -> (i32, i32) {
    %c0_i32 = arith.constant 0 : i32
    %c0_i32_0 = arith.constant 0 : i32
    return %arg0, %c0_i32 : i32, i32
  }
  func.func @transform_1(%arg0: i32) -> (i32, i32, i32) {
    %c0_i32 = arith.constant 0 : i32
    %c0_i32_0 = arith.constant 0 : i32
    %c0_i32_1 = arith.constant 0 : i32
    %c0_i32_2 = arith.constant 0 : i32
    return %c0_i32, %c0_i32_0, %c0_i32_1 : i32, i32, i32
  }
  func.func @transform_2(%arg0: i32) -> (i32, i32, i32) {
    %c0_i32 = arith.constant 0 : i32
    %c0_i32_0 = arith.constant 0 : i32
    %c0_i32_1 = arith.constant 0 : i32
    %c0_i32_2 = arith.constant 0 : i32
    return %c0_i32, %c0_i32_0, %c0_i32_1 : i32, i32, i32
  }
  func.func @transform_3(%arg0: i32) -> (i32, i32) {
    %c0_i32 = arith.constant 0 : i32
    %c0_i32_0 = arith.constant 0 : i32
    return %arg0, %c0_i32 : i32, i32
  }
}

</mosaic_0001>

<llo_original>
// kernel: _highway_forward_impl.1
$region0: #{_highway_forward_impl.1}
  #allocation0 [shape = 'u32[]', space=smem, size = 0x4, offset = 0x4, fixed_abs, tag = 'smem constant byte address 0x4 - core index']
  #allocation1 [shape = 'u32[144,128]{1,0:T(1,128)}', space=vmem, size = 0x12000, scoped, tag = 'internal scratch']
  %s0 = inlined_call_operand.vmem [shape: f32[16,128], index: 0, kind: input, shape index: {}]
  %s1 = inlined_call_operand.vmem [shape: f32[2,128,256], index: 1, kind: input, shape index: {}]
  %s2 = inlined_call_operand.vmem [shape: f32[2,1,256], index: 2, kind: input, shape index: {}]
  %s3 = inlined_call_operand.hbm [shape: f32[16,128], index: 3, kind: output, shape index: {}]
  %s4 = sld [smem:[#allocation0]]
  $region45: #{_highway_forward_impl.1} parent=0
    _
  %s6 = ssub.s32 1, %s4
  %s7 = scalar_select 0, %s6, %s4
  $region1: #{_highway_forward_impl.1} parent=0
    #allocation2 [shape = 'u8[8192]{0}', space=vmem, size = 0x2000, scoped, tag = 'output window, operand 0']
    #allocation3 [shape = 's32[2]{0}', space=sflag, size = 0x8, scoped, tag = 'scoped memory for _highway_forward_impl.1']
    %8 = vsyncpa [#allocation3], 0
    %s9 = scalar_lea.sflag [#allocation3], 1
    %10 = vsyncpa %s9, 0
    loop: start=0, step=1, limit=4
    $region2: #{_highway_forward_impl.1} parent=1 // loop_pre_header
      _
    $region3: #{_highway_forward_impl.1} parent=1 // loop_header
      %s12 = sphi 0, %s16
      %p13 = scmp.ge.s32.totalorder %s12, 4
      %s22 = sphi 0, %s24
      %s25 = sphi 0, %s22
      %s26 = sphi 0, %s25
      %s42 = sphi 0, %s26
      %s46 = sphi 0, %s46
      %s48 = sphi 0, %s46
      %s49 = sphi 0, %s48
      %s63 = sphi 0, %s49
      %s67 = sphi 0, %s67
      %s69 = sphi 0, %s67
      %s70 = sphi 0, %s69
      %s84 = sphi 0, %s70
      %s90 = sphi 0, %s92
      %s93 = sphi 0, %s90
      %s94 = sphi 0, %s93
      %s110 = sphi 0, %s94
    $region4: #{_highway_forward_impl.1} parent=1 // loop_header_branch
      %15 = sbr.rel (%p13) target = $region8
    $region5: #{_highway_forward_impl.1} parent=1 // loop_body
      %s17 = ssub.s32 %s12, 1
      %s18 = ssub.s32 %s12, 2
      %s19 = sadd.s32 %s12, 1
      %s20 = ssub.s32 %s12, %s19
      %p21 = scmp.eq.s32.totalorder %s20, 0
      %s23 = sadd.s32 %s22, 1
      %s24 = scalar_select %p21, %s22, %s23
      %p27 = pneg %p21
      %p28 = scmp.eq.s32.totalorder %s12, 1
      %p29 = por %p27, %p28
      %p30 = scmp.ne.s32.totalorder %s22, %s25
      %p31 = scmp.eq.s32.totalorder %s12, 0
      %p32 = por %p30, %p31
      %p33 = scmp.ne.s32.totalorder %s22, %s25
      %p34 = scmp.eq.s32.totalorder %s17, 1
      %p35 = por %p33, %p34
      %p36 = scmp.ne.s32.totalorder %s25, %s26
      %p37 = scmp.eq.s32.totalorder %s17, 0
      %p38 = por %p36, %p37
      %p39 = scmp.ne.s32.totalorder %s25, %s26
      %p40 = scmp.eq.s32.totalorder %s18, 1
      %p41 = por %p39, %p40
      %p43 = scmp.ne.s32.totalorder %s26, %s42
      %p44 = scmp.eq.s32.totalorder %s18, 0
      %p45 = por %p43, %p44
      %s47 = sadd.s32 %s46, 1
      %p50 = scmp.eq.s32.totalorder %s12, 1
      %p51 = scmp.ne.s32.totalorder %s46, %s48
      %p52 = scmp.eq.s32.totalorder %s12, 0
      %p53 = por %p51, %p52
      %p54 = scmp.ne.s32.totalorder %s46, %s48
      %p55 = scmp.eq.s32.totalorder %s17, 1
      %p56 = por %p54, %p55
      %p57 = scmp.ne.s32.totalorder %s48, %s49
      %p58 = scmp.eq.s32.totalorder %s17, 0
      %p59 = por %p57, %p58
      %p60 = scmp.ne.s32.totalorder %s48, %s49
      %p61 = scmp.eq.s32.totalorder %s18, 1
      %p62 = por %p60, %p61
      %p64 = scmp.ne.s32.totalorder %s49, %s63
      %p65 = scmp.eq.s32.totalorder %s18, 0
      %p66 = por %p64, %p65
      %s68 = sadd.s32 %s67, 1
      %p71 = scmp.eq.s32.totalorder %s12, 1
      %p72 = scmp.ne.s32.totalorder %s67, %s69
      %p73 = scmp.eq.s32.totalorder %s12, 0
      %p74 = por %p72, %p73
      %p75 = scmp.ne.s32.totalorder %s67, %s69
      %p76 = scmp.eq.s32.totalorder %s17, 1
      %p77 = por %p75, %p76
      %p78 = scmp.ne.s32.totalorder %s69, %s70
      %p79 = scmp.eq.s32.totalorder %s17, 0
      %p80 = por %p78, %p79
      %p81 = scmp.ne.s32.totalorder %s69, %s70
      %p82 = scmp.eq.s32.totalorder %s18, 1
      %p83 = por %p81, %p82
      %p85 = scmp.ne.s32.totalorder %s70, %s84
      %p86 = scmp.eq.s32.totalorder %s18, 0
      %p87 = por %p85, %p86
      %s88 = ssub.s32 %s12, %s19
      %p89 = scmp.eq.s32.totalorder %s88, 0
      %s91 = sadd.s32 %s90, 1
      %s92 = scalar_select %p89, %s90, %s91
      %p95 = pneg %p89
      %p96 = scmp.eq.s32.totalorder %s12, 1
      %p97 = por %p95, %p96
      %p98 = scmp.ne.s32.totalorder %s90, %s93
      %p99 = scmp.eq.s32.totalorder %s12, 0
      %p100 = por %p98, %p99
      %p101 = scmp.ne.s32.totalorder %s90, %s93
      %p102 = scmp.eq.s32.totalorder %s17, 1
      %p103 = por %p101, %p102
      %p104 = scmp.ne.s32.totalorder %s93, %s94
      %p105 = scmp.eq.s32.totalorder %s17, 0
      %p106 = por %p104, %p105
      %p107 = scmp.ne.s32.totalorder %s93, %s94
      %p108 = scmp.eq.s32.totalorder %s18, 1
      %p109 = por %p107, %p108
      %p111 = scmp.ne.s32.totalorder %s94, %s110
      %p112 = scmp.eq.s32.totalorder %s18, 0
      %p113 = por %p111, %p112
      %p114 = scmp.le.s32.totalorder 1, %s12
      %p115 = scmp.lt.s32.totalorder %s12, 3
      %p116 = pnand %p114, %p115
      %p117 = pneg %p116
      // Predicated region
      $region9: #{_highway_forward_impl.1} parent=5 // pred_check
        _
      $region10: #{_highway_forward_impl.1} parent=5 // pred_check_branch
        %119 = sbr.rel (%p116) target = $region12
      $region11: #{_highway_forward_impl.1} parent=5 // pred_region
        %s120 = ssub.s32 %s12, 1
        // Predicated region
        $region13: #{_highway_forward_impl.1} parent=11 // pred_check
          %p121 = pneg %p59
        $region14: #{_highway_forward_impl.1} parent=11 // pred_check_branch
          %123 = sbr.rel (%p121) target = $region16
        $region15: #{_highway_forward_impl.1} parent=11 // pred_region
          _
        $region16: #{_highway_forward_impl.1} parent=11 // pred_fallthru
          _
        // Predicated region
        $region17: #{_highway_forward_impl.1} parent=11 // pred_check
          %p124 = pneg %p80
        $region18: #{_highway_forward_impl.1} parent=11 // pred_check_branch
          %126 = sbr.rel (%p124) target = $region20
        $region19: #{_highway_forward_impl.1} parent=11 // pred_region
          _
        $region20: #{_highway_forward_impl.1} parent=11 // pred_fallthru
          _
      $region12: #{_highway_forward_impl.1} parent=5 // pred_fallthru
        _
      %p127 = scmp.lt.s32.totalorder %s12, 2
      // Predicated region
      $region21: #{_highway_forward_impl.1} parent=5 // pred_check
        %p128 = pneg %p127
      $region22: #{_highway_forward_impl.1} parent=5 // pred_check_branch
        %130 = sbr.rel (%p128) target = $region24
      $region23: #{_highway_forward_impl.1} parent=5 // pred_region
        // Predicated region
        $region25: #{_highway_forward_impl.1} parent=23 // pred_check
          %p131 = pneg %p32
        $region26: #{_highway_forward_impl.1} parent=23 // pred_check_branch
          %133 = sbr.rel (%p131) target = $region28
        $region27: #{_highway_forward_impl.1} parent=23 // pred_region
          %p134 = scmp.lt.s32.totalorder %s12, 1
          %s135 = scalar_select %p134, %s12, 1
          %s136 = smul.addr %s135, 8
          %s137 = scalar_lea.vmem %s0, %s136
        $region28: #{_highway_forward_impl.1} parent=23 // pred_fallthru
          _
      $region24: #{_highway_forward_impl.1} parent=5 // pred_fallthru
        _
      %p138 = scmp.le.s32.totalorder 1, %s12
      %p139 = scmp.lt.s32.totalorder %s12, 3
      %p140 = pnand %p138, %p139
      %p141 = pneg %p140
      // Predicated region
      $region29: #{_highway_forward_impl.1} parent=5 // pred_check
        _
      $region30: #{_highway_forward_impl.1} parent=5 // pred_check_branch
        %143 = sbr.rel (%p140) target = $region32
      $region31: #{_highway_forward_impl.1} parent=5 // pred_region
        %s144 = ssub.s32 %s12, 1
        %p145 = scmp.lt.s32.totalorder %s17, 1
        %s146 = scalar_select %p145, %s17, 1
        %s147 = smul.addr %s146, 8
        %s148 = scalar_lea.vmem %s0, %s147
        %p149 = pneg %p38
        %p150 = pneg %p35
        %p151 = pneg %p59
        %p152 = pneg %p56
        %p153 = pneg %p80
        %p154 = pneg %p77
        %p155 = pneg %p106
        %p156 = pneg %p103
        %s157 = sand.u32 %s93, 1
        %s158 = scalar_lea.sflag [#allocation3], %s157
        %s159 = sand.u32 %s93, 1
        %s160 = smul.addr %s159, 8
        %s161 = scalar_lea.vmem [#allocation2], %s160
        %p162 = scmp.lt.s32.totalorder %s17, 1
        %s163 = scalar_select %p162, %s17, 1
        %s164 = smul.addr %s163, 8
        %s165 = scalar_lea.vmem %s0, %s164
        %v166 = vld [vmem:[%s165] sm:$0xff]
        %v167 = vld [vmem:[%s1] sm:$0xff]
        %v168 = vld [vmem:[%s1 + $0x8] sm:$0xff]
        %v169 = vld [vmem:[%s1 + $0x10] sm:$0xff]
        %v170 = vld [vmem:[%s1 + $0x18] sm:$0xff]
        %v171 = vld [vmem:[%s1 + $0x20] sm:$0xff]
        %v172 = vld [vmem:[%s1 + $0x28] sm:$0xff]
        %v173 = vld [vmem:[%s1 + $0x30] sm:$0xff]
        %v174 = vld [vmem:[%s1 + $0x38] sm:$0xff]
        %v175 = vld [vmem:[%s1 + $0x40] sm:$0xff]
        %v176 = vld [vmem:[%s1 + $0x48] sm:$0xff]
        %v177 = vld [vmem:[%s1 + $0x50] sm:$0xff]
        %v178 = vld [vmem:[%s1 + $0x58] sm:$0xff]
        %v179 = vld [vmem:[%s1 + $0x60] sm:$0xff]
        %v180 = vld [vmem:[%s1 + $0x68] sm:$0xff]
        %v181 = vld [vmem:[%s1 + $0x70] sm:$0xff]
        %v182 = vld [vmem:[%s1 + $0x78] sm:$0xff]
        %v183 = vld [vmem:[%s1 + $0x80] sm:$0xff]
        %v184 = vld [vmem:[%s1 + $0x88] sm:$0xff]
        %v185 = vld [vmem:[%s1 + $0x90] sm:$0xff]
        %v186 = vld [vmem:[%s1 + $0x98] sm:$0xff]
        %v187 = vld [vmem:[%s1 + $0xa0] sm:$0xff]
        %v188 = vld [vmem:[%s1 + $0xa8] sm:$0xff]
        %v189 = vld [vmem:[%s1 + $0xb0] sm:$0xff]
        %v190 = vld [vmem:[%s1 + $0xb8] sm:$0xff]
        %v191 = vld [vmem:[%s1 + $0xc0] sm:$0xff]
        %v192 = vld [vmem:[%s1 + $0xc8] sm:$0xff]
        %v193 = vld [vmem:[%s1 + $0xd0] sm:$0xff]
        %v194 = vld [vmem:[%s1 + $0xd8] sm:$0xff]
        %v195 = vld [vmem:[%s1 + $0xe0] sm:$0xff]
        %v196 = vld [vmem:[%s1 + $0xe8] sm:$0xff]
        %v197 = vld [vmem:[%s1 + $0xf0] sm:$0xff]
        %v198 = vld [vmem:[%s1 + $0xf8] sm:$0xff]
        %v199 = vld [vmem:[%s2] sm:$0x3]
        %v201 = vlaneseq
        %v202 = vshrl.u32 %v201, 7
        %v203 = vsub.s32 0, %v202
        %v204 = vrot.slane %v199, %v203
        %v205 = vlaneseq
        %v206 = vshrl.u32 %v205, 7
        %v207 = vsub.s32 1, %v206
        %v208 = vrot.slane %v199, %v207
        %211 = vmatprep.subr.mxu0 %v168
        %212 = vmatpush1.msra.mxu0 %v167
        %213 = vmatprep.subr.mxu0 %v170
        %214 = vmatpush1.msra.mxu0 %v169
        %215 = vmatprep.subr.mxu0 %v172
        %216 = vmatpush1.msra.mxu0 %v171
        %217 = vmatprep.subr.mxu0 %v174
        %218 = vmatpush1.msra.mxu0 %v173
        %219 = vmatprep.subr.mxu0 %v176
        %220 = vmatpush1.msra.mxu0 %v175
        %221 = vmatprep.subr.mxu0 %v178
        %222 = vmatpush1.msra.mxu0 %v177
        %223 = vmatprep.subr.mxu0 %v180
        %224 = vmatpush1.msra.mxu0 %v179
        %225 = vmatprep.subr.mxu0 %v182
        %226 = vmatpush1.msra.mxu0 %v181
        %227 = vmatprep.subr.mxu0 %v184
        %228 = vmatpush1.msra.mxu0 %v183
        %229 = vmatprep.subr.mxu0 %v186
        %230 = vmatpush1.msra.mxu0 %v185
        %231 = vmatprep.subr.mxu0 %v188
        %232 = vmatpush1.msra.mxu0 %v187
        %233 = vmatprep.subr.mxu0 %v190
        %234 = vmatpush1.msra.mxu0 %v189
        %235 = vmatprep.subr.mxu0 %v192
        %236 = vmatpush1.msra.mxu0 %v191
        %237 = vmatprep.subr.mxu0 %v194
        %238 = vmatpush1.msra.mxu0 %v193
        %239 = vmatprep.subr.mxu0 %v196
        %240 = vmatpush1.msra.mxu0 %v195
        %241 = vmatprep.subr.mxu0 %v198
        %242 = vmatpush1.msra.mxu0 %v197
        %243 = vmatprep.subr.mxu0 0.0
        %244 = vmatpush1.msra.mxu0 0.0
        %245 = vmatprep.subr.mxu0 0.0
        %246 = vmatpush1.msra.mxu0 0.0
        %247 = vmatprep.subr.mxu0 0.0
        %248 = vmatpush1.msra.mxu0 0.0
        %249 = vmatprep.subr.mxu0 0.0
        %250 = vmatpush1.msra.mxu0 0.0
        %251 = vmatprep.subr.mxu0 0.0
        %252 = vmatpush1.msra.mxu0 0.0
        %253 = vmatprep.subr.mxu0 0.0
        %254 = vmatpush1.msra.mxu0 0.0
        %255 = vmatprep.subr.mxu0 0.0
        %256 = vmatpush1.msra.mxu0 0.0
        %257 = vmatprep.subr.mxu0 0.0
        %258 = vmatpush1.msra.mxu0 0.0
        %259 = vmatprep.subr.mxu0 0.0
        %260 = vmatpush1.msra.mxu0 0.0
        %261 = vmatprep.subr.mxu0 0.0
        %262 = vmatpush1.msra.mxu0 0.0
        %263 = vmatprep.subr.mxu0 0.0
        %264 = vmatpush1.msra.mxu0 0.0
        %265 = vmatprep.subr.mxu0 0.0
        %266 = vmatpush1.msra.mxu0 0.0
        %267 = vmatprep.subr.mxu0 0.0
        %268 = vmatpush1.msra.mxu0 0.0
        %269 = vmatprep.subr.mxu0 0.0
        %270 = vmatpush1.msra.mxu0 0.0
        %271 = vmatprep.subr.mxu0 0.0
        %272 = vmatpush1.msra.mxu0 0.0
        %273 = vmatprep.subr.mxu0 0.0
        %274 = vmatpush1.msra.mxu0 0.0
        %275 = vmatprep.mubr.f32.mxu0 0.0
        %276 = vmatmul.mubr.f32.gmra.mrb[0].mxu0 %v166
        %v277 = vpop.f32.mrb[0].mxu0
        %v278 = vadd.f32 %v204, %v277
        %v279 = vpop.f32.mrb[0].mxu0
        %v280 = vadd.f32 %v208, %v279
        %281 = vdwg.mxu0
        %v282 = vmax.f32 %v278, 0.0
        %v283 = vxor.u32 %v280, 2147483648
        %v284 = vmul.f32 %v283, 1.442695
        %v285 = vpow.pop %v284
        %v286 = vadd.f32 %v285, 1.0
        %v287 = vrcp.pop %v286
        %v288 = vmul.f32 1.0, %v287
        %v289 = vsub.f32 %v282, %v166
        %v290 = vmul.f32 %v288, %v289
        %v291 = vadd.f32 %v166, %v290
        %s292 = scalar_lea.vmem %s1, 256
        %v293 = vld [vmem:[%s292] sm:$0xff]
        %v294 = vld [vmem:[%s292 + $0x8] sm:$0xff]
        %v295 = vld [vmem:[%s292 + $0x10] sm:$0xff]
        %v296 = vld [vmem:[%s292 + $0x18] sm:$0xff]
        %v297 = vld [vmem:[%s292 + $0x20] sm:$0xff]
        %v298 = vld [vmem:[%s292 + $0x28] sm:$0xff]
        %v299 = vld [vmem:[%s292 + $0x30] sm:$0xff]
        %v300 = vld [vmem:[%s292 + $0x38] sm:$0xff]
        %v301 = vld [vmem:[%s292 + $0x40] sm:$0xff]
        %v302 = vld [vmem:[%s292 + $0x48] sm:$0xff]
        %v303 = vld [vmem:[%s292 + $0x50] sm:$0xff]
        %v304 = vld [vmem:[%s292 + $0x58] sm:$0xff]
        %v305 = vld [vmem:[%s292 + $0x60] sm:$0xff]
        %v306 = vld [vmem:[%s292 + $0x68] sm:$0xff]
        %v307 = vld [vmem:[%s292 + $0x70] sm:$0xff]
        %v308 = vld [vmem:[%s292 + $0x78] sm:$0xff]
        %v309 = vld [vmem:[%s292 + $0x80] sm:$0xff]
        %v310 = vld [vmem:[%s292 + $0x88] sm:$0xff]
        %v311 = vld [vmem:[%s292 + $0x90] sm:$0xff]
        %v312 = vld [vmem:[%s292 + $0x98] sm:$0xff]
        %v313 = vld [vmem:[%s292 + $0xa0] sm:$0xff]
        %v314 = vld [vmem:[%s292 + $0xa8] sm:$0xff]
        %v315 = vld [vmem:[%s292 + $0xb0] sm:$0xff]
        %v316 = vld [vmem:[%s292 + $0xb8] sm:$0xff]
        %v317 = vld [vmem:[%s292 + $0xc0] sm:$0xff]
        %v318 = vld [vmem:[%s292 + $0xc8] sm:$0xff]
        %v319 = vld [vmem:[%s292 + $0xd0] sm:$0xff]
        %v320 = vld [vmem:[%s292 + $0xd8] sm:$0xff]
        %v321 = vld [vmem:[%s292 + $0xe0] sm:$0xff]
        %v322 = vld [vmem:[%s292 + $0xe8] sm:$0xff]
        %v323 = vld [vmem:[%s292 + $0xf0] sm:$0xff]
        %v324 = vld [vmem:[%s292 + $0xf8] sm:$0xff]
        %s325 = scalar_lea.vmem %s2, 2
        %v326 = vld [vmem:[%s325] sm:$0x3]
        %v328 = vlaneseq
        %v329 = vshrl.u32 %v328, 7
        %v330 = vsub.s32 0, %v329
        %v331 = vrot.slane %v326, %v330
        %v332 = vlaneseq
        %v333 = vshrl.u32 %v332, 7
        %v334 = vsub.s32 1, %v333
        %v335 = vrot.slane %v326, %v334
        %338 = vmatprep.subr.mxu0 %v294
        %339 = vmatpush1.msra.mxu0 %v293
        %340 = vmatprep.subr.mxu0 %v296
        %341 = vmatpush1.msra.mxu0 %v295
        %342 = vmatprep.subr.mxu0 %v298
        %343 = vmatpush1.msra.mxu0 %v297
        %344 = vmatprep.subr.mxu0 %v300
        %345 = vmatpush1.msra.mxu0 %v299
        %346 = vmatprep.subr.mxu0 %v302
        %347 = vmatpush1.msra.mxu0 %v301
        %348 = vmatprep.subr.mxu0 %v304
        %349 = vmatpush1.msra.mxu0 %v303
        %350 = vmatprep.subr.mxu0 %v306
        %351 = vmatpush1.msra.mxu0 %v305
        %352 = vmatprep.subr.mxu0 %v308
        %353 = vmatpush1.msra.mxu0 %v307
        %354 = vmatprep.subr.mxu0 %v310
        %355 = vmatpush1.msra.mxu0 %v309
        %356 = vmatprep.subr.mxu0 %v312
        %357 = vmatpush1.msra.mxu0 %v311
        %358 = vmatprep.subr.mxu0 %v314
        %359 = vmatpush1.msra.mxu0 %v313
        %360 = vmatprep.subr.mxu0 %v316
        %361 = vmatpush1.msra.mxu0 %v315
        %362 = vmatprep.subr.mxu0 %v318
        %363 = vmatpush1.msra.mxu0 %v317
        %364 = vmatprep.subr.mxu0 %v320
        %365 = vmatpush1.msra.mxu0 %v319
        %366 = vmatprep.subr.mxu0 %v322
        %367 = vmatpush1.msra.mxu0 %v321
        %368 = vmatprep.subr.mxu0 %v324
        %369 = vmatpush1.msra.mxu0 %v323
        %370 = vmatprep.subr.mxu0 0.0
        %371 = vmatpush1.msra.mxu0 0.0
        %372 = vmatprep.subr.mxu0 0.0
        %373 = vmatpush1.msra.mxu0 0.0
        %374 = vmatprep.subr.mxu0 0.0
        %375 = vmatpush1.msra.mxu0 0.0
        %376 = vmatprep.subr.mxu0 0.0
        %377 = vmatpush1.msra.mxu0 0.0
        %378 = vmatprep.subr.mxu0 0.0
        %379 = vmatpush1.msra.mxu0 0.0
        %380 = vmatprep.subr.mxu0 0.0
        %381 = vmatpush1.msra.mxu0 0.0
        %382 = vmatprep.subr.mxu0 0.0
        %383 = vmatpush1.msra.mxu0 0.0
        %384 = vmatprep.subr.mxu0 0.0
        %385 = vmatpush1.msra.mxu0 0.0
        %386 = vmatprep.subr.mxu0 0.0
        %387 = vmatpush1.msra.mxu0 0.0
        %388 = vmatprep.subr.mxu0 0.0
        %389 = vmatpush1.msra.mxu0 0.0
        %390 = vmatprep.subr.mxu0 0.0
        %391 = vmatpush1.msra.mxu0 0.0
        %392 = vmatprep.subr.mxu0 0.0
        %393 = vmatpush1.msra.mxu0 0.0
        %394 = vmatprep.subr.mxu0 0.0
        %395 = vmatpush1.msra.mxu0 0.0
        %396 = vmatprep.subr.mxu0 0.0
        %397 = vmatpush1.msra.mxu0 0.0
        %398 = vmatprep.subr.mxu0 0.0
        %399 = vmatpush1.msra.mxu0 0.0
        %400 = vmatprep.subr.mxu0 0.0
        %401 = vmatpush1.msra.mxu0 0.0
        %402 = vmatprep.mubr.f32.mxu0 0.0
        %403 = vmatmul.mubr.f32.gmra.mrb[0].mxu0 %v291
        %v404 = vpop.f32.mrb[0].mxu0
        %v405 = vadd.f32 %v331, %v404
        %v406 = vpop.f32.mrb[0].mxu0
        %v407 = vadd.f32 %v335, %v406
        %408 = vdwg.mxu0
        %v409 = vmax.f32 %v405, 0.0
        %v410 = vxor.u32 %v407, 2147483648
        %v411 = vmul.f32 %v410, 1.442695
        %v412 = vpow.pop %v411
        %v413 = vadd.f32 %v412, 1.0
        %v414 = vrcp.pop %v413
        %v415 = vmul.f32 1.0, %v414
        %v416 = vsub.f32 %v409, %v291
        %v417 = vmul.f32 %v415, %v416
        %v418 = vadd.f32 %v291, %v417
        %419 = vst [vmem:[%s161] sm:$0xff] %v418
        %s420 = sand.u32 %s93, 1
        %s421 = scalar_lea.sflag [#allocation3], %s420
        %s422 = sand.u32 %s93, 1
        %s423 = smul.addr %s422, 8
        %s424 = scalar_lea.vmem [#allocation2], %s423
        // Predicated region
        $region33: #{_highway_forward_impl.1} parent=31 // pred_check
          %p425 = pneg %p103
        $region34: #{_highway_forward_impl.1} parent=31 // pred_check_branch
          %427 = sbr.rel (%p425) target = $region36
        $region35: #{_highway_forward_impl.1} parent=31 // pred_region
          %s429 = ssub.s32 128, 128
          %430 = vsyncadd %s421, %s429
          %s431 = smul.addr %s17, 128
          %s432 = scalar_lea.hbm %s3, %s431
          %s434 = sshll.u32 %s424, 4
          %s435 = int_to_ptr.vmem [resolvable:$true] %s434
          %437 = dma.vmem_to_hbm [thread:$0]  %s435, 128, %s432, %s421
        $region36: #{_highway_forward_impl.1} parent=31 // pred_fallthru
          _
      $region32: #{_highway_forward_impl.1} parent=5 // pred_fallthru
        _
      %p438 = scmp.le.s32.totalorder 2, %s12
      // Predicated region
      $region37: #{_highway_forward_impl.1} parent=5 // pred_check
        %p439 = pneg %p438
      $region38: #{_highway_forward_impl.1} parent=5 // pred_check_branch
        %441 = sbr.rel (%p439) target = $region40
      $region39: #{_highway_forward_impl.1} parent=5 // pred_region
        %s442 = ssub.s32 %s12, 2
        // Predicated region
        $region41: #{_highway_forward_impl.1} parent=39 // pred_check
          %p443 = pneg %p109
        $region42: #{_highway_forward_impl.1} parent=39 // pred_check_branch
          %445 = sbr.rel (%p443) target = $region44
        $region43: #{_highway_forward_impl.1} parent=39 // pred_region
          %s446 = sand.u32 %s94, 1
          %s447 = scalar_lea.sflag [#allocation3], %s446
          %s448 = sand.u32 %s94, 1
          %s449 = smul.addr %s448, 8
          %s450 = scalar_lea.vmem [#allocation2], %s449
          %451 = dma.done %s447, 128
        $region44: #{_highway_forward_impl.1} parent=39 // pred_fallthru
          _
      $region40: #{_highway_forward_impl.1} parent=5 // pred_fallthru
        _
    $region6: #{_highway_forward_impl.1} parent=1 // loop_footer
      %s16 = sadd.s32 1, %s12
    $region7: #{_highway_forward_impl.1} parent=1 // loop_footer_branch
      %11 = sbr.rel target = $region3
    $region8: #{_highway_forward_impl.1} parent=1 // loop_exit
      _
    %452 = vsyncpa [#allocation3], 1
    %s453 = scalar_lea.sflag [#allocation3], 1
    %454 = vsyncpa %s453, 1

</llo_original>
